<compile_context>
chip_gen: v7x
topology: tpu7x:2x2x1
jax: 0.10.0
libtpu: 0.0.40
codegen_flags: <defaults>
</compile_context>

<pallas_src>
import functools

import jax
import jax.numpy as jnp
from jax import lax
from jax.experimental import pallas as pl
from jax.experimental.pallas import tpu as pltpu

LATENT_DIM = 50
D_PAD = 128          # 50 -> 128 (lane-aligned)


def _round_up(n, m):
    return (n + m - 1) // m * m


# ----------------------------------------------------------------------------
# Pallas kernel: one batch tile per grid step; u/w/b resident in VMEM
# ----------------------------------------------------------------------------
def flow_layer_kernel(z_ref, u_ref, w_ref, b_ref, out_ref):
    z = z_ref[...]                                                # (TB, 128) f32
    u = u_ref[...]                                                # (1, 128)
    w = w_ref[...]                                                # (1, 128)
    b = b_ref[...]                                                # (1, 1)

    # linear = z @ w + b   (padded lanes of z and w are zero)
    lin = jnp.sum(z * w, axis=-1, keepdims=True) + b              # (TB, 1)  XLU reduce
    act = jnp.tanh(lin)                                           # EUP

    z_new = z + u * act                                           # (TB, 128) VPU

    # psi @ u == (1 - act^2) * (w . u)  -> fold the per-row reduce into a constant
    wu = jnp.sum(w * u, axis=-1, keepdims=True)                   # (1, 1)
    det = jnp.abs(1.0 + (1.0 - act * act) * wu)                   # (TB, 1)
    logdet = jnp.log(det + 1e-6)                                  # EUP

    # Lane-dense packed output: [ z_new(50) | logdet(1) | zeros ] -> one unmasked vst.
    lane = lax.broadcasted_iota(jnp.int32, z_new.shape, 1)
    out_ref[...] = jnp.where(lane == LATENT_DIM, logdet, z_new)


# ----------------------------------------------------------------------------
# Wrapper
# ----------------------------------------------------------------------------
@functools.partial(jax.jit, static_argnames=("tb",))
def flow_layer_forward(z, u, w, b, tb=None):
    """z: (B, 50) f32, u: (50,), w: (50, 1), b: (1,).  Returns (z_new, log_det_jacobian)."""
    B = z.shape[0]
    if tb is None:
        # Big tiles amortize the ~0.35 us/step pipeline overhead; (512,128) f32 tiles
        # (in + packed out, double-buffered) are ~1 MiB of VMEM -> far under budget.
        tb = 512 if B >= 512 else _round_up(B, 8)
    Bp = _round_up(B, tb)

    # pad batch + latent dim (padded lanes are zero -> math unchanged)
    z_p = jnp.zeros((Bp, D_PAD), jnp.float32).at[:B, :LATENT_DIM].set(
        z.astype(jnp.float32))
    u_p = jnp.zeros((1, D_PAD), jnp.float32).at[0, :LATENT_DIM].set(
        u.astype(jnp.float32).reshape(-1))
    w_p = jnp.zeros((1, D_PAD), jnp.float32).at[0, :LATENT_DIM].set(
        w.astype(jnp.float32).reshape(-1))
    b_p = b.astype(jnp.float32).reshape(1, 1)

    grid = (Bp // tb,)

    in_specs = [
        pl.BlockSpec((tb, D_PAD), lambda i: (i, 0)),      # z (batch-tiled, pipelined)
        pl.BlockSpec((1, D_PAD), lambda i: (0, 0)),       # u (resident)
        pl.BlockSpec((1, D_PAD), lambda i: (0, 0)),       # w (resident)
        pl.BlockSpec((1, 1), lambda i: (0, 0)),           # b (resident)
    ]
    out_specs = pl.BlockSpec((tb, D_PAD), lambda i: (i, 0))  # packed [z_new | logdet]

    # advisory cost estimate (mem-bound elementwise kernel)
    flops = Bp * D_PAD * 8
    transcendentals = Bp * 2                               # tanh + log per row
    bytes_accessed = Bp * D_PAD * 4 * 2 + 3 * D_PAD * 4

    out = pl.pallas_call(
        flow_layer_kernel,
        grid=grid,
        in_specs=in_specs,
        out_specs=out_specs,
        out_shape=jax.ShapeDtypeStruct((Bp, D_PAD), jnp.float32),
        compiler_params=pltpu.CompilerParams(
            dimension_semantics=("parallel",),
            vmem_limit_bytes=32 * 1024 * 1024,
        ),
        cost_estimate=pl.CostEstimate(
            flops=flops,
            transcendentals=transcendentals,
            bytes_accessed=bytes_accessed,
        ),
    )(z_p, u_p, w_p, b_p)

    z_new = out[:B, :LATENT_DIM]
    log_det_jacobian = out[:B, LATENT_DIM]
    return z_new, log_det_jacobian


# ----------------------------------------------------------------------------
# Pure-JAX reference (mirrors the PyTorch FlowLayer forward exactly)
# ----------------------------------------------------------------------------
def reference_forward(z, u, w, b):
    linear = z @ w + b                                     # (B, 1)
    activation = jnp.tanh(linear)
    z_new = z + u[None, :] * activation
    psi = (1.0 - activation ** 2) * w[:, 0]                # (B, D)
    det_jacobian = jnp.abs(1.0 + psi @ u)                  # (B,)
    log_det_jacobian = jnp.log(det_jacobian + 1e-6)
    return z_new, log_det_jacobian


if __name__ == "__main__":
    key = jax.random.PRNGKey(0)
    kz, ku, kw = jax.random.split(key, 3)

    B = 16
    z = jax.random.normal(kz, (B, LATENT_DIM), dtype=jnp.float32)
    u = jax.random.normal(ku, (LATENT_DIM,), dtype=jnp.float32)
    w = jax.random.normal(kw, (LATENT_DIM, 1), dtype=jnp.float32)
    b = jnp.zeros((1,), jnp.float32)

    z_new, logdet = flow_layer_forward(z, u, w, b)
    jax.block_until_ready((z_new, logdet))

    r_z_new, r_logdet = reference_forward(z, u, w, b)
    assert z_new.shape == (B, LATENT_DIM)
    assert logdet.shape == (B,)
    assert jnp.allclose(z_new, r_z_new, rtol=1e-4, atol=1e-4)
    assert jnp.allclose(logdet, r_logdet, rtol=1e-4, atol=1e-4)

    print("KERNEL_OK")
</pallas_src>

<mosaic_0001>
module attributes {stable_mosaic.version = 11 : i64} {
  func.func @flow_layer_kernel(%arg0: i32, %arg1: memref<16x128xf32, #tpu.memory_space<vmem>>, %arg2: memref<1x128xf32, #tpu.memory_space<vmem>>, %arg3: memref<1x128xf32, #tpu.memory_space<vmem>>, %arg4: memref<1x1xf32, #tpu.memory_space<vmem>>, %arg5: memref<16x128xf32, #tpu.memory_space<vmem>>) attributes {dimension_semantics = [#tpu.dimension_semantics<parallel>], iteration_bounds = array<i64: 1>, scalar_prefetch = 0 : i64, scratch_operands = 0 : i64, tpu.core_type = #tpu.core_type<tc>, window_params = [{transform_indices = @transform_0, window_bounds = array<i64: 16, 128>}, {pipeline_mode = #tpu.pipeline_mode<synchronous>, transform_indices = @transform_1, window_bounds = array<i64: 1, 128>}, {pipeline_mode = #tpu.pipeline_mode<synchronous>, transform_indices = @transform_2, window_bounds = array<i64: 1, 128>}, {pipeline_mode = #tpu.pipeline_mode<synchronous>, transform_indices = @transform_3, window_bounds = array<i64: 1, 1>}, {transform_indices = @transform_4, window_bounds = array<i64: 16, 128>}]} {
    %c0 = arith.constant 0 : index
    %c0_0 = arith.constant 0 : index
    %0 = vector.load %arg1[%c0, %c0_0] : memref<16x128xf32, #tpu.memory_space<vmem>>, vector<16x128xf32>
    %c0_1 = arith.constant 0 : index
    %c0_2 = arith.constant 0 : index
    %1 = vector.load %arg2[%c0_1, %c0_2] : memref<1x128xf32, #tpu.memory_space<vmem>>, vector<1x128xf32>
    %c0_3 = arith.constant 0 : index
    %c0_4 = arith.constant 0 : index
    %2 = vector.load %arg3[%c0_3, %c0_4] : memref<1x128xf32, #tpu.memory_space<vmem>>, vector<1x128xf32>
    %c0_5 = arith.constant 0 : index
    %c0_6 = arith.constant 0 : index
    %3 = vector.load %arg4[%c0_5, %c0_6] : memref<1x1xf32, #tpu.memory_space<vmem>>, vector<1x1xf32>
    %4 = vector.broadcast %2 : vector<1x128xf32> to vector<16x128xf32>
    %5 = arith.mulf %0, %4 : vector<16x128xf32>
    %cst = arith.constant dense<0.000000e+00> : vector<16xf32>
    %6 = vector.multi_reduction <add>, %5, %cst [1] : vector<16x128xf32> to vector<16xf32>
    %7 = vector.shape_cast %6 : vector<16xf32> to vector<16x1xf32>
    %8 = vector.broadcast %3 : vector<1x1xf32> to vector<16x1xf32>
    %9 = arith.addf %7, %8 : vector<16x1xf32>
    %10 = math.tanh %9 : vector<16x1xf32>
    %11 = vector.broadcast %1 : vector<1x128xf32> to vector<16x128xf32>
    %12 = vector.broadcast %10 : vector<16x1xf32> to vector<16x128xf32>
    %13 = arith.mulf %11, %12 : vector<16x128xf32>
    %14 = arith.addf %0, %13 : vector<16x128xf32>
    %15 = arith.mulf %2, %1 : vector<1x128xf32>
    %cst_7 = arith.constant dense<0.000000e+00> : vector<1xf32>
    %16 = vector.multi_reduction <add>, %15, %cst_7 [1] : vector<1x128xf32> to vector<1xf32>
    %17 = vector.shape_cast %16 : vector<1xf32> to vector<1x1xf32>
    %18 = arith.mulf %10, %10 : vector<16x1xf32>
    %cst_8 = arith.constant 1.000000e+00 : f32
    %19 = vector.broadcast %cst_8 : f32 to vector<16x1xf32>
    %20 = arith.subf %19, %18 : vector<16x1xf32>
    %21 = vector.broadcast %17 : vector<1x1xf32> to vector<16x1xf32>
    %22 = arith.mulf %20, %21 : vector<16x1xf32>
    %cst_9 = arith.constant 1.000000e+00 : f32
    %23 = vector.broadcast %cst_9 : f32 to vector<16x1xf32>
    %24 = arith.addf %23, %22 : vector<16x1xf32>
    %25 = math.absf %24 : vector<16x1xf32>
    %cst_10 = arith.constant 9.99999997E-7 : f32
    %26 = vector.broadcast %cst_10 : f32 to vector<16x1xf32>
    %27 = arith.addf %25, %26 : vector<16x1xf32>
    %28 = math.log %27 : vector<16x1xf32>
    %29 = tpu.iota {dimensions = array<i32: 1>} : vector<16x128xi32>
    %c50_i32 = arith.constant 50 : i32
    %30 = vector.broadcast %c50_i32 : i32 to vector<16x128xi32>
    %31 = arith.cmpi eq, %29, %30 : vector<16x128xi32>
    %32 = vector.shape_cast %28 : vector<16x1xf32> to vector<16x1xf32>
    %33 = vector.broadcast %32 : vector<16x1xf32> to vector<16x128xf32>
    %34 = arith.select %31, %33, %14 : vector<16x128xi1>, vector<16x128xf32>
    %c0_11 = arith.constant 0 : index
    %c0_12 = arith.constant 0 : index
    %35 = vector.load %arg5[%c0_11, %c0_12] : memref<16x128xf32, #tpu.memory_space<vmem>>, vector<16x128xf32>
    tpu.vector_store %arg5[%c0_11, %c0_12], %34 {strides = array<i32>} : memref<16x128xf32, #tpu.memory_space<vmem>>, vector<16x128xf32>,
    return
  }
  func.func @transform_0(%arg0: i32) -> (i32, i32) {
    %c0_i32 = arith.constant 0 : i32
    %c0_i32_0 = arith.constant 0 : i32
    return %arg0, %c0_i32 : i32, i32
  }
  func.func @transform_1(%arg0: i32) -> (i32, i32) {
    %c0_i32 = arith.constant 0 : i32
    %c0_i32_0 = arith.constant 0 : i32
    %c0_i32_1 = arith.constant 0 : i32
    return %c0_i32, %c0_i32_0 : i32, i32
  }
  func.func @transform_2(%arg0: i32) -> (i32, i32) {
    %c0_i32 = arith.constant 0 : i32
    %c0_i32_0 = arith.constant 0 : i32
    %c0_i32_1 = arith.constant 0 : i32
    return %c0_i32, %c0_i32_0 : i32, i32
  }
  func.func @transform_3(%arg0: i32) -> (i32, i32) {
    %c0_i32 = arith.constant 0 : i32
    %c0_i32_0 = arith.constant 0 : i32
    %c0_i32_1 = arith.constant 0 : i32
    return %c0_i32, %c0_i32_0 : i32, i32
  }
  func.func @transform_4(%arg0: i32) -> (i32, i32) {
    %c0_i32 = arith.constant 0 : i32
    %c0_i32_0 = arith.constant 0 : i32
    return %arg0, %c0_i32 : i32, i32
  }
}

</mosaic_0001>

<llo_original>
// kernel: flow_layer_forward.1
$region0: #{flow_layer_forward.1}
  #allocation0 [shape = 'u32[]', space=smem, size = 0x4, offset = 0x4, fixed_abs, tag = 'smem constant byte address 0x4 - core index']
  #allocation1 [shape = 'u32[144,128]{1,0:T(1,128)}', space=vmem, size = 0x12000, scoped, tag = 'internal scratch']
  #allocation2 [shape = 'f32[1,1]{1,0:T(1,128)S(1)}', space=vmem, size = 0x200, scoped, tag = 'scoped memory for flow_layer_forward.1']
  %s0 = inlined_call_operand.vmem [shape: f32[16,128], index: 0, kind: input, shape index: {}]
  %s1 = inlined_call_operand.vmem [shape: f32[1,128], index: 1, kind: input, shape index: {}]
  %s2 = inlined_call_operand.vmem [shape: f32[1,128], index: 2, kind: input, shape index: {}]
  %s3 = inlined_call_operand.<no memory space> [shape: f32[1,1], index: 3, kind: input, shape index: {}]
  %s4 = inlined_call_operand.vmem [shape: f32[16,128], index: 4, kind: output, shape index: {}]
  %s5 = sld [smem:[#allocation0]]
  $region26: #{flow_layer_forward.1} parent=0
    _
  %s7 = ssub.s32 1, %s5
  %s8 = scalar_select 0, %s7, %s5
  %v9 = vstv %s3
  %10 = vst [vmem:[#allocation2] sm:$0x1] %v9
  // Predicated region
  $region2: #{flow_layer_forward.1} parent=0 // pred_check
    _
  $region3: #{flow_layer_forward.1} parent=0 // pred_check_branch
    %12 = sbr.rel (0) target = $region5
  $region4: #{flow_layer_forward.1} parent=0 // pred_region
    _
  $region5: #{flow_layer_forward.1} parent=0 // pred_fallthru
    _
  // Predicated region
  $region6: #{flow_layer_forward.1} parent=0 // pred_check
    _
  $region7: #{flow_layer_forward.1} parent=0 // pred_check_branch
    %14 = sbr.rel (0) target = $region9
  $region8: #{flow_layer_forward.1} parent=0 // pred_region
    _
  $region9: #{flow_layer_forward.1} parent=0 // pred_fallthru
    _
  // Predicated region
  $region10: #{flow_layer_forward.1} parent=0 // pred_check
    _
  $region11: #{flow_layer_forward.1} parent=0 // pred_check_branch
    %16 = sbr.rel (0) target = $region13
  $region12: #{flow_layer_forward.1} parent=0 // pred_region
    _
  $region13: #{flow_layer_forward.1} parent=0 // pred_fallthru
    _
  // Predicated region
  $region14: #{flow_layer_forward.1} parent=0 // pred_check
    _
  $region15: #{flow_layer_forward.1} parent=0 // pred_check_branch
    %18 = sbr.rel (0) target = $region17
  $region16: #{flow_layer_forward.1} parent=0 // pred_region
    _
  $region17: #{flow_layer_forward.1} parent=0 // pred_fallthru
    _
  %v19 = vld [vmem:[%s0] sm:$0xff]
  %v20 = vld [vmem:[%s0 + $0x8] sm:$0xff]
  %v21 = vld [vmem:[%s1] sm:$0x1]
  %v22 = vld [vmem:[%s2] sm:$0x1]
  %v23 = vld [vmem:[#allocation2] sm:$0x1]
  %v25 = vlaneseq
  %v26 = vshrl.u32 %v25, 7
  %v27 = vsub.s32 0, %v26
  %v28 = vrot.slane %v22, %v27
  %v30 = vmul.f32 %v19, %v28
  %v31 = vmul.f32 %v20, %v28
  %32 = vadd.xlane.f32.xlu0 %v30
  %v33 = vpop.xlane.xlu0 %32
  %34 = vadd.xlane.f32.xlu0 %v31
  %v35 = vpop.xlane.xlu0 %34
  %v37 = vlaneseq
  %v38 = vshrl.u32 %v37, 7
  %v39 = vsub.s32 0, %v38
  %v40 = vrot.slane %v23, %v39
  %v42 = vadd.f32 %v33, %v40
  %v43 = vadd.f32 %v35, %v40
  %v44 = vtanh.pop %v42
  %v45 = vtanh.pop %v43
  %v47 = vlaneseq
  %v48 = vshrl.u32 %v47, 7
  %v49 = vsub.s32 0, %v48
  %v50 = vrot.slane %v21, %v49
  %53 = vset.pattern.permute.xlu0 0
  %54 = vperm.xlu0 %53, %v44
  %v55 = vpop.permute.xlu0 %54
  %58 = vset.pattern.permute.xlu0 0
  %59 = vperm.xlu0 %58, %v45
  %v60 = vpop.permute.xlu0 %59
  %v62 = vmul.f32 %v50, %v55
  %v63 = vmul.f32 %v50, %v60
  %v64 = vadd.f32 %v19, %v62
  %v65 = vadd.f32 %v20, %v63
  %v66 = vmul.f32 %v22, %v21
  %vm67 = vcmask 1040384
  %v68 = vsel %vm67, %v66, 0.0
  %69 = vadd.xlane.f32.xlu0 %v68
  %v70 = vpop.xlane.xlu0 %69
  %v71 = vmul.f32 %v44, %v44
  %v72 = vmul.f32 %v45, %v45
  %v73 = vsub.f32 1.0, %v71
  %v74 = vsub.f32 1.0, %v72
  %v75 = vlaneseq
  %v76 = vshrl.u32 %v75, 7
  %v77 = vsub.s32 0, %v76
  %v78 = vrot.slane %v70, %v77
  %v79 = vmul.f32 %v73, %v78
  %v80 = vmul.f32 %v74, %v78
  %v81 = vadd.f32 %v79, 1.0
  %v82 = vadd.f32 %v80, 1.0
  %v83 = vand.u32 2147483647, %v81
  %v84 = vand.u32 2147483647, %v82
  %v85 = vadd.f32 %v83, 1e-06
  %v86 = vadd.f32 %v84, 1e-06
  %v87 = vlog2.pop %v85
  %v88 = vmul.f32 %v87, 0.6931472
  %v89 = vlog2.pop %v86
  %v90 = vmul.f32 %v89, 0.6931472
  %v91 = vlaneseq
  %v92 = vand.u32 %v91, 127
  %vm93 = vcmp.eq.s32.totalorder %v92, 50
  %95 = vset.pattern.permute.xlu0 0
  %96 = vperm.xlu0 %95, %v88
  %v97 = vpop.permute.xlu0 %96
  %100 = vset.pattern.permute.xlu0 0
  %101 = vperm.xlu0 %100, %v90
  %v102 = vpop.permute.xlu0 %101
  %v104 = vsel %vm93, %v97, %v64
  %v105 = vsel %vm93, %v102, %v65
  %106 = vst [vmem:[%s4] sm:$0xff] %v104
  %107 = vst [vmem:[%s4 + $0x8] sm:$0xff] %v105
  // Predicated region
  $region18: #{flow_layer_forward.1} parent=0 // pred_check
    _
  $region19: #{flow_layer_forward.1} parent=0 // pred_check_branch
    %109 = sbr.rel (0) target = $region21
  $region20: #{flow_layer_forward.1} parent=0 // pred_region
    _
  $region21: #{flow_layer_forward.1} parent=0 // pred_fallthru
    _
  // Predicated region
  $region22: #{flow_layer_forward.1} parent=0 // pred_check
    _
  $region23: #{flow_layer_forward.1} parent=0 // pred_check_branch
    %111 = sbr.rel (0) target = $region25
  $region24: #{flow_layer_forward.1} parent=0 // pred_region
    _
  $region25: #{flow_layer_forward.1} parent=0 // pred_fallthru
    _

</llo_original>
